<compile_context>
chip_gen: v6e
topology: v6e:2x2x1
jax: 0.10.0
libtpu: 0.0.40
codegen_flags: <defaults>
</compile_context>

<pallas_src>
import math
import jax
import jax.numpy as jnp
from jax.experimental import pallas as pl
from jax.experimental.pallas import tpu as pltpu

_LANE = 128
_MIB = 1024 * 1024


def _round_up(n, m):
    return ((n + m - 1) // m) * m


def _sublane_multiple(dtype):
    """Packed-sublane multiple for the dtype: f32 -> 8, bf16 -> 16, int8/fp8 -> 32."""
    return max(8, 32 // jnp.dtype(dtype).itemsize)


def _vmem_limit_bytes():
    """Generation-aware scoped-VMEM limit.

    Physical VMEM per TensorCore: v5e/v5p/v6e = 128 MiB, v7x = 64 MiB.
    We raise the scoped limit (defaults are only 16/32/32 MiB) and leave
    headroom for Mosaic-internal scratch.
    """
    try:
        kind = jax.devices()[0].device_kind.lower()
    except Exception:  # be conservative if the query fails
        kind = ""
    if "v7" in kind or "7x" in kind:
        phys = 64 * _MIB
    else:
        phys = 128 * _MIB
    return min(phys - 8 * _MIB, 100 * _MIB)


def _pick_tile_b(batch, in_features, x_dtype, out_dtype, vmem_limit):
    """Largest batch tile whose pipeline footprint fits the VMEM budget.

    Footprint model (VMEM lane-pads the last dim to 128):
      x:    2 buffers * tile_b * F_pad * x_isz     (double-buffered stream)
      out:  2 buffers * tile_b * 128   * o_isz     (C=2 is lane-padded to 128)
      W:    1 buffer  * F_pad * 128    * w_isz     (single-buffered, resident)
      bias: negligible
    """
    sub = _sublane_multiple(x_dtype)
    x_isz = jnp.dtype(x_dtype).itemsize
    o_isz = jnp.dtype(out_dtype).itemsize
    f_pad = _round_up(in_features, _LANE)

    budget = vmem_limit - 4 * _MIB                     # slack for misc scratch
    w_bytes = f_pad * _LANE * x_isz                    # weight, single buffer
    per_row = 2 * f_pad * x_isz + 2 * _LANE * o_isz    # x + out, double-buffered
    avail = max(budget - w_bytes, 0)

    tile_b = avail // per_row if per_row else sub
    tile_b = min(tile_b, 32768, _round_up(batch, sub))  # never tile past the batch
    tile_b = max(sub, (tile_b // sub) * sub)            # packed-sublane multiple
    return int(tile_b)


def _nhlp_kernel(x_ref, w_ref, b_ref, o_ref):
    # x_ref: [TILE_B, F], w_ref: [F, C], b_ref: [1, C], o_ref: [TILE_B, C]
    acc = jnp.dot(x_ref[...], w_ref[...], preferred_element_type=jnp.float32)
    o_ref[...] = (acc + b_ref[...]).astype(o_ref.dtype)


def prepare_nhlp_params(weight, bias, compute_dtype=jnp.float32):
    """One-time parameter prep (hoisted out of the per-call path).

    weight: [n_classes, in_features] as in nn.Linear.
    Returns (weight_t [in_features, n_classes] in compute dtype,
             bias2d   [1, n_classes]           in f32).
    """
    weight_t = weight.T.astype(compute_dtype)
    bias2d = bias.reshape(1, -1).astype(jnp.float32)
    return weight_t, bias2d


def nhlp_forward(x, weight_t, bias2d, *, tile_b=None):
    """NHLP forward pass: x.view(-1, F) @ W.T + b.

    Args:
      x:        any shape whose trailing dims flatten to in_features.
                Accepted in its native dtype (f32 or bf16); no forced upcast.
      weight_t: [in_features, n_classes] — pre-transposed nn.Linear weight
                (see prepare_nhlp_params; cast/transpose hoisted out of here).
      bias2d:   [1, n_classes] f32 (or [n_classes], reshaped here).
      tile_b:   optional batch-tile override; by default derived from
                in_features and the per-generation VMEM budget.
    Returns:
      [batch, n_classes] in x's dtype.
    """
    in_features, n_classes = weight_t.shape
    x2d = x.reshape(-1, in_features)
    batch = x2d.shape[0]
    out_dtype = x2d.dtype

    # These are no-ops when params were prepared via prepare_nhlp_params.
    if weight_t.dtype != x2d.dtype:
        weight_t = weight_t.astype(x2d.dtype)
    if bias2d.ndim == 1:
        bias2d = bias2d.reshape(1, n_classes)
    if bias2d.dtype != jnp.float32:
        bias2d = bias2d.astype(jnp.float32)

    vmem_limit = _vmem_limit_bytes()
    if tile_b is None:
        tile_b = _pick_tile_b(batch, in_features, x2d.dtype, out_dtype, vmem_limit)
    else:
        tile_b = max(_sublane_multiple(x2d.dtype),
                     _round_up(tile_b, _sublane_multiple(x2d.dtype)))

    # Partial trailing tile is masked by Pallas; no jnp.pad (no extra HBM copy
    # of x, no streaming of up to tile_b-1 garbage rows).
    num_tiles = pl.cdiv(batch, tile_b)

    x_isz = jnp.dtype(x2d.dtype).itemsize
    o_isz = jnp.dtype(out_dtype).itemsize
    cost = pl.CostEstimate(
        flops=2 * batch * in_features * n_classes,
        transcendentals=0,
        bytes_accessed=(batch * in_features * x_isz          # x in
                        + batch * n_classes * o_isz          # out
                        + in_features * n_classes * x_isz    # W
                        + n_classes * 4),                    # bias
    )

    out = pl.pallas_call(
        _nhlp_kernel,
        out_shape=jax.ShapeDtypeStruct((batch, n_classes), out_dtype),
        grid=(num_tiles,),
        in_specs=[
            # x streams tile-by-tile (double-buffered by the pipeline).
            pl.BlockSpec((tile_b, in_features), lambda i: (i, 0)),
            # Weight / bias: grid-invariant -> single-buffered, VMEM-resident.
            pl.BlockSpec((in_features, n_classes), lambda i: (0, 0),
                         pipeline_mode=pl.Buffered(1)),
            pl.BlockSpec((1, n_classes), lambda i: (0, 0),
                         pipeline_mode=pl.Buffered(1)),
        ],
        out_specs=pl.BlockSpec((tile_b, n_classes), lambda i: (i, 0)),
        compiler_params=pltpu.CompilerParams(
            # Batch tiles are independent -> shard across v7x's 2 TensorCores.
            dimension_semantics=("parallel",),
            vmem_limit_bytes=int(vmem_limit),
        ),
        cost_estimate=cost,
    )(x2d, weight_t, bias2d)

    return out


def init_nhlp_params(key, in_features, n_classes=2):
    """Deterministic init matching nn.Linear.reset_parameters (uniform +/- 1/sqrt(fan_in))."""
    kw, kb = jax.random.split(key)
    bound = 1.0 / math.sqrt(in_features)
    weight = jax.random.uniform(
        kw, (n_classes, in_features), minval=-bound, maxval=bound, dtype=jnp.float32
    )
    bias = jax.random.uniform(
        kb, (n_classes,), minval=-bound, maxval=bound, dtype=jnp.float32
    )
    return weight, bias


if __name__ == "__main__":
    key = jax.random.PRNGKey(0)
    k_x, k_p = jax.random.split(key)

    # Small EEG-like input: batch=2, channels=4, time=16  -> in_features = 64
    B, C, T = 2, 4, 16
    in_features = C * T
    n_classes = 2

    x = jax.random.normal(k_x, (B, C, T), dtype=jnp.float32)
    weight, bias = init_nhlp_params(k_p, in_features, n_classes)

    # One-time parameter prep (transpose + cast + reshape hoisted out of calls).
    weight_t, bias2d = prepare_nhlp_params(weight, bias, compute_dtype=x.dtype)

    out = nhlp_forward(x, weight_t, bias2d)
    out = jax.block_until_ready(out)

    # Reference check against plain JAX (same math as torch nn.Linear).
    ref = x.reshape(-1, in_features) @ weight.T + bias
    assert out.shape == (B, n_classes)
    assert jnp.allclose(out, ref, atol=1e-5, rtol=1e-5)

    print("KERNEL_OK")
</pallas_src>

<mosaic_0001>
module attributes {stable_mosaic.version = 11 : i64} {
  func.func @_nhlp_kernel(%arg0: i32, %arg1: memref<8x64xf32, #tpu.memory_space<vmem>>, %arg2: memref<64x2xf32, #tpu.memory_space<vmem>>, %arg3: memref<1x2xf32, #tpu.memory_space<vmem>>, %arg4: memref<8x2xf32, #tpu.memory_space<vmem>>) attributes {dimension_semantics = [#tpu.dimension_semantics<parallel>], iteration_bounds = array<i64: 1>, scalar_prefetch = 0 : i64, scratch_operands = 0 : i64, tpu.core_type = #tpu.core_type<tc>, window_params = [{transform_indices = @transform_0, window_bounds = array<i64: 8, 64>}, {pipeline_mode = #tpu.pipeline_mode<synchronous>, transform_indices = @transform_1, window_bounds = array<i64: 64, 2>}, {pipeline_mode = #tpu.pipeline_mode<synchronous>, transform_indices = @transform_2, window_bounds = array<i64: 1, 2>}, {transform_indices = @transform_3, window_bounds = array<i64: 8, 2>}]} {
    %c0 = arith.constant 0 : index
    %c0_0 = arith.constant 0 : index
    %0 = vector.load %arg1[%c0, %c0_0] : memref<8x64xf32, #tpu.memory_space<vmem>>, vector<8x64xf32>
    %c0_1 = arith.constant 0 : index
    %c0_2 = arith.constant 0 : index
    %1 = vector.load %arg2[%c0_1, %c0_2] : memref<64x2xf32, #tpu.memory_space<vmem>>, vector<64x2xf32>
    %cst = arith.constant dense<0.000000e+00> : vector<8x2xf32>
    %2 = tpu.matmul %0, %1, %cst {dimension_numbers = #tpu.dot_dimension_numbers<[1], [0], [0], [1], [0, 0, 1, 1], [], []>} : vector<8x64xf32>, vector<64x2xf32>, vector<8x2xf32> -> vector<8x2xf32>
    %c0_3 = arith.constant 0 : index
    %c0_4 = arith.constant 0 : index
    %3 = vector.load %arg3[%c0_3, %c0_4] : memref<1x2xf32, #tpu.memory_space<vmem>>, vector<1x2xf32>
    %4 = vector.broadcast %3 : vector<1x2xf32> to vector<8x2xf32>
    %5 = arith.addf %2, %4 : vector<8x2xf32>
    %c0_5 = arith.constant 0 : index
    %c0_6 = arith.constant 0 : index
    %6 = vector.load %arg4[%c0_5, %c0_6] : memref<8x2xf32, #tpu.memory_space<vmem>>, vector<8x2xf32>
    tpu.vector_store %arg4[%c0_5, %c0_6], %5 {strides = array<i32>} : memref<8x2xf32, #tpu.memory_space<vmem>>, vector<8x2xf32>,
    return
  }
  func.func @transform_0(%arg0: i32) -> (i32, i32) {
    %c0_i32 = arith.constant 0 : i32
    %c0_i32_0 = arith.constant 0 : i32
    return %arg0, %c0_i32 : i32, i32
  }
  func.func @transform_1(%arg0: i32) -> (i32, i32) {
    %c0_i32 = arith.constant 0 : i32
    %c0_i32_0 = arith.constant 0 : i32
    %c0_i32_1 = arith.constant 0 : i32
    return %c0_i32, %c0_i32_0 : i32, i32
  }
  func.func @transform_2(%arg0: i32) -> (i32, i32) {
    %c0_i32 = arith.constant 0 : i32
    %c0_i32_0 = arith.constant 0 : i32
    %c0_i32_1 = arith.constant 0 : i32
    return %c0_i32, %c0_i32_0 : i32, i32
  }
  func.func @transform_3(%arg0: i32) -> (i32, i32) {
    %c0_i32 = arith.constant 0 : i32
    %c0_i32_0 = arith.constant 0 : i32
    return %arg0, %c0_i32 : i32, i32
  }
}

</mosaic_0001>

<llo_original>
// kernel: tpu_custom_call.1
$region0: #{tpu_custom_call.1}
  #allocation0 [shape = 'u32[]', space=smem, size = 0x4, offset = 0x4, fixed_abs, tag = 'smem constant byte address 0x4 - core index']
  #allocation1 [shape = 'u32[144,128]{1,0:T(1,128)}', space=vmem, size = 0x12000, scoped, tag = 'internal scratch']
  %s0 = inlined_call_operand.vmem [shape: f32[2,64], index: 0, kind: input, shape index: {}]
  %s1 = inlined_call_operand.vmem [shape: f32[64,2], index: 1, kind: input, shape index: {}]
  %s2 = inlined_call_operand.vmem [shape: f32[1,2], index: 2, kind: input, shape index: {}]
  %s3 = inlined_call_operand.hbm [shape: f32[2,2], index: 3, kind: output, shape index: {}]
  %s4 = sld [smem:[#allocation0]]
  $region22: #{tpu_custom_call.1} parent=0
    _
  %s6 = ssub.s32 1, %s4
  %s7 = scalar_select 0, %s6, %s4
  $region1: #{tpu_custom_call.1} parent=0
    #allocation2 [shape = 'u8[4096]{0}', space=vmem, size = 0x1000, scoped, tag = 'output window, operand 0, single buffered']
    #allocation3 [shape = 's32[1]{0}', space=sflag, size = 0x4, scoped, tag = 'scoped memory for tpu_custom_call.1']
    %8 = vsyncpa [#allocation3], 0
    // Predicated region
    $region2: #{tpu_custom_call.1} parent=1 // pred_check
      _
    $region3: #{tpu_custom_call.1} parent=1 // pred_check_branch
      %10 = sbr.rel (0) target = $region5
    $region4: #{tpu_custom_call.1} parent=1 // pred_region
      _
    $region5: #{tpu_custom_call.1} parent=1 // pred_fallthru
      _
    // Predicated region
    $region6: #{tpu_custom_call.1} parent=1 // pred_check
      _
    $region7: #{tpu_custom_call.1} parent=1 // pred_check_branch
      %12 = sbr.rel (0) target = $region9
    $region8: #{tpu_custom_call.1} parent=1 // pred_region
      _
    $region9: #{tpu_custom_call.1} parent=1 // pred_fallthru
      _
    // Predicated region
    $region10: #{tpu_custom_call.1} parent=1 // pred_check
      _
    $region11: #{tpu_custom_call.1} parent=1 // pred_check_branch
      %14 = sbr.rel (0) target = $region13
    $region12: #{tpu_custom_call.1} parent=1 // pred_region
      _
    $region13: #{tpu_custom_call.1} parent=1 // pred_fallthru
      _
    %v15 = vld [vmem:[%s0] sm:$0xff]
    %v16 = vld [vmem:[%s1] sm:$0xff]
    %v17 = vld [vmem:[%s1 + $0x8] sm:$0xff]
    %v18 = vld [vmem:[%s1 + $0x10] sm:$0xff]
    %v19 = vld [vmem:[%s1 + $0x18] sm:$0xff]
    %v20 = vld [vmem:[%s1 + $0x20] sm:$0xff]
    %v21 = vld [vmem:[%s1 + $0x28] sm:$0xff]
    %v22 = vld [vmem:[%s1 + $0x30] sm:$0xff]
    %v23 = vld [vmem:[%s1 + $0x38] sm:$0xff]
    %v24 = vld [vmem:[%s2] sm:$0x1]
    %v26 = vlaneseq
    %v27 = vshrl.u32 %v26, 7
    %v28 = vsub.s32 0, %v27
    %v29 = vrot.slane %v24, %v28
    %vm31 = vcmask 523264
    %v33 = vsel %vm31, %v15, 0
    %35 = vmatprep.subr.mxu0 0.0
    %36 = vmatpush1.msra.mxu0 0.0
    %37 = vmatprep.subr.mxu0 0.0
    %38 = vmatpush1.msra.mxu0 0.0
    %39 = vmatprep.subr.mxu0 0.0
    %40 = vmatpush1.msra.mxu0 0.0
    %41 = vmatprep.subr.mxu0 0.0
    %42 = vmatpush1.msra.mxu0 0.0
    %43 = vmatprep.subr.mxu0 0.0
    %44 = vmatpush1.msra.mxu0 0.0
    %45 = vmatprep.subr.mxu0 0.0
    %46 = vmatpush1.msra.mxu0 0.0
    %47 = vmatprep.subr.mxu0 0.0
    %48 = vmatpush1.msra.mxu0 0.0
    %49 = vmatprep.subr.mxu0 0.0
    %50 = vmatpush1.msra.mxu0 0.0
    %51 = vmatprep.subr.mxu0 0.0
    %52 = vmatpush1.msra.mxu0 %v23
    %53 = vmatprep.subr.mxu0 0.0
    %54 = vmatpush1.msra.mxu0 %v22
    %55 = vmatprep.subr.mxu0 0.0
    %56 = vmatpush1.msra.mxu0 %v21
    %57 = vmatprep.subr.mxu0 0.0
    %58 = vmatpush1.msra.mxu0 %v20
    %59 = vmatprep.subr.mxu0 0.0
    %60 = vmatpush1.msra.mxu0 %v19
    %61 = vmatprep.subr.mxu0 0.0
    %62 = vmatpush1.msra.mxu0 %v18
    %63 = vmatprep.subr.mxu0 0.0
    %64 = vmatpush1.msra.mxu0 %v17
    %65 = vmatprep.subr.mxu0 0.0
    %66 = vmatpush1.msra.mxu0 %v16
    %67 = vmatprep.subr.mxu0 0.0
    %68 = vmatpush2.msra.mxu0 0.0
    %69 = vmatprep.subr.mxu0 0.0
    %70 = vmatpush2.msra.mxu0 0.0
    %71 = vmatprep.subr.mxu0 0.0
    %72 = vmatpush2.msra.mxu0 0.0
    %73 = vmatprep.subr.mxu0 0.0
    %74 = vmatpush2.msra.mxu0 0.0
    %75 = vmatprep.subr.mxu0 0.0
    %76 = vmatpush2.msra.mxu0 0.0
    %77 = vmatprep.subr.mxu0 0.0
    %78 = vmatpush2.msra.mxu0 0.0
    %79 = vmatprep.subr.mxu0 0.0
    %80 = vmatpush2.msra.mxu0 0.0
    %81 = vmatprep.subr.mxu0 0.0
    %82 = vmatpush2.msra.mxu0 0.0
    %83 = vmatprep.subr.mxu0 0.0
    %84 = vmatpush2.msra.mxu0 0.0
    %85 = vmatprep.subr.mxu0 0.0
    %86 = vmatpush2.msra.mxu0 0.0
    %87 = vmatprep.subr.mxu0 0.0
    %88 = vmatpush2.msra.mxu0 0.0
    %89 = vmatprep.subr.mxu0 0.0
    %90 = vmatpush2.msra.mxu0 0.0
    %91 = vmatprep.subr.mxu0 0.0
    %92 = vmatpush2.msra.mxu0 0.0
    %93 = vmatprep.subr.mxu0 0.0
    %94 = vmatpush2.msra.mxu0 0.0
    %95 = vmatprep.subr.mxu0 0.0
    %96 = vmatpush2.msra.mxu0 0.0
    %97 = vmatprep.subr.mxu0 0.0
    %98 = vmatpush2.msra.mxu0 0.0
    %99 = vmatprep.mubr.f32.mxu0 0.0
    %100 = vmatmul.mubr.f32.gmra.mxu0 %v33
    %v101 = vpop.f32.mrf.mxu0
    %v102 = vadd.f32 %v29, %v101
    %v103 = vpop.f32.mrf.mxu0
    %104 = vdwg.mxu0
    %vm105 = vcmask 15360
    %106 = vst.msk [vmem:[#allocation2] sm:$0xff] %vm105, %v102
    // Predicated region
    $region14: #{tpu_custom_call.1} parent=1 // pred_check
      _
    $region15: #{tpu_custom_call.1} parent=1 // pred_check_branch
      %108 = sbr.rel (0) target = $region17
    $region16: #{tpu_custom_call.1} parent=1 // pred_region
      %s110 = ssub.s32 128, 32
      %111 = vsyncadd [#allocation3], %s110
      %s112 = sshll.u32 [#allocation2], 4
      %s113 = int_to_ptr.vmem [resolvable:$true] %s112
      %118 = dma.vmem_to_hbm [thread:$0]  %s113, 32, %s3, [#allocation3], 32, 32, 2
    $region17: #{tpu_custom_call.1} parent=1 // pred_fallthru
      _
    // Predicated region
    $region18: #{tpu_custom_call.1} parent=1 // pred_check
      _
    $region19: #{tpu_custom_call.1} parent=1 // pred_check_branch
      %120 = sbr.rel (0) target = $region21
    $region20: #{tpu_custom_call.1} parent=1 // pred_region
      %121 = dma.done [#allocation3], 128
    $region21: #{tpu_custom_call.1} parent=1 // pred_fallthru
      _
    %122 = vsyncpa [#allocation3], 1

</llo_original>
